<compile_context>
chip_gen: v6e
topology: v6e:2x2x1
jax: 0.10.0
libtpu: 0.0.40
codegen_flags: <defaults>
</compile_context>

<pallas_src>
import functools

import jax
import jax.numpy as jnp
from jax.experimental import pallas as pl
from jax.experimental.pallas import tpu as pltpu


def _round_up(x, m):
    return ((x + m - 1) // m) * m


def _cdiv(a, b):
    return -(-a // b)


def _num_tensorcores():
    """Best-effort TensorCore count of the attached chip (1 on v5e/v6e)."""
    try:
        kind = str(jax.devices()[0].device_kind).lower()
    except Exception:
        return 1
    if "v4" in kind or "v5p" in kind or "v7" in kind or "7x" in kind:
        return 2  # dual-TC / megacore chips benefit from a parallel lead axis
    return 1


_VMEM_BUDGET = 24 << 20          # target working set per pipelined grid step
_VMEM_LIMIT_DEFAULT = 40 << 20   # scoped VMEM limit we request (< v7x's 64 MiB)


def _row_bytes(n_classes, in_itemsize, extra_row_bytes):
    """Rough per-row VMEM cost model for one pipelined grid step."""
    return (
        2 * n_classes * in_itemsize   # double-buffered logits block (native dtype)
        + 2 * 512                     # double-buffered (tile,1) i32 targets (lane-padded)
        + 4 * n_classes * 4           # live (tile, C) f32 / i32 temporaries
        + 6 * 512                     # live (tile, 1) keepdims temporaries + row mask
        + extra_row_bytes             # accumulator scratch / output block
    )


def _pick_tile_rows(n_rows, n_classes, in_itemsize, *, min_steps, extra_row_bytes):
    """Pick tile rows from a byte budget (f32 working set aware), no row ceiling."""
    rb = _row_bytes(n_classes, in_itemsize, extra_row_bytes)
    align = 16 if in_itemsize == 2 else 8          # bf16 sublane packing
    cap = max(align, (_VMEM_BUDGET // rb) // align * align)
    want = _round_up(max(1, _cdiv(n_rows, max(1, min_steps))), align)
    return max(align, min(cap, want)), rb


def _vmem_limit(tile_n, rb):
    est = tile_n * rb
    return int(min(56 << 20, max(_VMEM_LIMIT_DEFAULT, 2 * est)))


def _focal_rows(x, t, alpha, gamma):
    """Per-row focal loss.  x: (T, C) f32, t: (T, 1) int32 -> (T, 1) f32."""
    tn, c = x.shape
    col = jax.lax.broadcasted_iota(jnp.int32, (tn, c), 1)
    hot = col == t                                          # (T, C), no one-hot in HBM
    # cross_entropy(x, t, 'none') = logsumexp(x) - x[t]
    m = jnp.max(x, axis=-1, keepdims=True)
    lse = m + jnp.log(jnp.sum(jnp.exp(x - m), axis=-1, keepdims=True))
    x_t = jnp.sum(jnp.where(hot, x, 0.0), axis=-1, keepdims=True)
    ce = lse - x_t                                          # (T, 1), >= 0
    pt = jnp.exp(-ce)
    omp = jnp.maximum(1.0 - pt, 0.0)   # pt can round slightly above 1
    g = float(gamma)
    if g == int(g) and 0 <= int(g) <= 8:                    # integer gamma: multiplies
        w = jnp.ones_like(omp)
        for _ in range(int(g)):
            w = w * omp
    else:
        w = omp ** g
    return (alpha * w) * ce


def _focal_reduce_kernel(logits_ref, targets_ref, out_ref, acc_ref, *,
                         alpha, gamma, n_valid, tile_n, steps_per_core):
    c = pl.program_id(0)            # partial / TensorCore index ("parallel")
    i = pl.program_id(1)            # streaming step within partial ("arbitrary")

    @pl.when(i == 0)
    def _():
        acc_ref[...] = jnp.zeros_like(acc_ref)

    x = logits_ref[...].astype(jnp.float32)        # (tile_n, C)
    t = targets_ref[...]                           # (tile_n, 1) int32
    focal = _focal_rows(x, t, alpha, gamma)        # (tile_n, 1)

    # Mask rows past the end of the batch.  The ragged final block and any
    # clamped duplicate step of the last core both land here; jnp.where is
    # NaN-safe for garbage rows, and the mask precedes the accumulation.
    blk = c * steps_per_core + i                   # nominal (unclamped) block index
    row = jax.lax.broadcasted_iota(jnp.int32, focal.shape, 0) + blk * tile_n
    acc_ref[...] += jnp.where(row < n_valid, focal, 0.0)   # vector partial, no per-step reduce

    @pl.when(i == pl.num_programs(1) - 1)
    def _():
        # Single cross-lane/sublane reduce per partial.
        out_ref[...] = jnp.broadcast_to(
            jnp.sum(acc_ref[...]).reshape(1, 1, 1), out_ref.shape)


def _focal_none_kernel(logits_ref, targets_ref, out_ref, *, alpha, gamma):
    x = logits_ref[...].astype(jnp.float32)
    t = targets_ref[...]
    out_ref[...] = _focal_rows(x, t, alpha, gamma)


def focal_loss(logits, targets, *, alpha=0.25, gamma=2.0, reduction="mean"):
    """Focal loss over (N, C) logits and (N,) integer class targets."""
    # TODO(synk): cross_entropy's ignore_index / class weights are not handled;
    # targets are assumed to be valid class ids in [0, C).
    # TODO(synk): add a class-dimension tiled (online logsumexp) path for
    # vocab-scale C; the current 8/16-row floor can exceed the VMEM budget for
    # extremely wide logits.
    n, c = logits.shape
    in_itemsize = jnp.dtype(logits.dtype).itemsize
    alpha = float(alpha)
    gamma = float(gamma)
    targets = targets.astype(jnp.int32).reshape(n, 1)

    if reduction in ("mean", "sum"):
        num_tc = _num_tensorcores()
        # accumulator scratch (tile,1) f32 -> 512 B/row, single-buffered.
        tile_n, rb = _pick_tile_rows(n, c, in_itemsize,
                                     min_steps=2 * num_tc, extra_row_bytes=512)
        n_blocks = _cdiv(n, tile_n)
        num_partials = max(1, min(num_tc, n_blocks))
        steps_per_core = _cdiv(n_blocks, num_partials)

        def idx(ci, ii, s=steps_per_core, nb=n_blocks):
            # Clamp: any overhanging step of the last partial re-reads the
            # final in-bounds block; its rows are masked out in the kernel.
            return (jnp.minimum(ci * s + ii, nb - 1), 0)

        kernel = functools.partial(
            _focal_reduce_kernel, alpha=alpha, gamma=gamma,
            n_valid=n, tile_n=tile_n, steps_per_core=steps_per_core)

        partials = pl.pallas_call(
            kernel,
            out_shape=jax.ShapeDtypeStruct((num_partials, 8, 128), jnp.float32),
            grid_spec=pltpu.PrefetchScalarGridSpec(
                num_scalar_prefetch=0,
                grid=(num_partials, steps_per_core),
                in_specs=[
                    pl.BlockSpec((tile_n, c), idx),
                    pl.BlockSpec((tile_n, 1), idx),
                ],
                out_specs=pl.BlockSpec((1, 8, 128), lambda ci, ii: (ci, 0, 0)),
                scratch_shapes=[pltpu.VMEM((tile_n, 1), jnp.float32)],
            ),
            compiler_params=pltpu.CompilerParams(
                dimension_semantics=("parallel", "arbitrary"),
                vmem_limit_bytes=_vmem_limit(tile_n, rb)),
        )(logits, targets)

        total = jnp.sum(partials[:, 0, 0])
        if reduction == "mean":
            return total / jnp.float32(n)   # divide exactly once, in the wrapper
        return total

    # reduction == 'none': per-sample losses, >= ~4 grid steps for pipelining.
    # (tile,1) f32 output block, double-buffered -> 1024 B/row in the budget.
    # TODO(synk): a lane-dense (1, tile_n) targets/output layout avoids masked
    # 1-of-128-lane stores but needs an in-kernel lane<->sublane relayout;
    # kept the (tile_n, 1) DMA layout for lowering robustness.
    tile_n, rb = _pick_tile_rows(n, c, in_itemsize,
                                 min_steps=4, extra_row_bytes=1024)
    grid_n = _cdiv(n, tile_n)
    kernel = functools.partial(_focal_none_kernel, alpha=alpha, gamma=gamma)
    out = pl.pallas_call(
        kernel,
        out_shape=jax.ShapeDtypeStruct((n, 1), jnp.float32),
        grid_spec=pltpu.PrefetchScalarGridSpec(
            num_scalar_prefetch=0,
            grid=(grid_n,),
            in_specs=[
                pl.BlockSpec((tile_n, c), lambda i: (i, 0)),
                pl.BlockSpec((tile_n, 1), lambda i: (i, 0)),
            ],
            out_specs=pl.BlockSpec((tile_n, 1), lambda i: (i, 0)),
        ),
        compiler_params=pltpu.CompilerParams(
            dimension_semantics=("parallel",),
            vmem_limit_bytes=_vmem_limit(tile_n, rb)),
    )(logits, targets)
    return out[:, 0]


def _focal_loss_ref(logits, targets, alpha=0.25, gamma=2.0, reduction="mean"):
    # Pure-JAX reference mirroring the PyTorch forward.
    logits = logits.astype(jnp.float32)
    lse = jax.scipy.special.logsumexp(logits, axis=-1)
    x_t = jnp.take_along_axis(logits, targets[:, None].astype(jnp.int32),
                              axis=-1)[:, 0]
    ce = lse - x_t
    pt = jnp.exp(-ce)
    focal = alpha * (1.0 - pt) ** gamma * ce
    if reduction == "mean":
        return jnp.mean(focal)
    elif reduction == "sum":
        return jnp.sum(focal)
    return focal


if __name__ == "__main__":
    key = jax.random.PRNGKey(0)
    k_logits, k_targets = jax.random.split(key)

    N, C = 16, 32
    logits = jax.random.normal(k_logits, (N, C), dtype=jnp.float32)
    targets = jax.random.randint(k_targets, (N,), 0, C, dtype=jnp.int32)

    # mean
    out = jax.block_until_ready(focal_loss(logits, targets, reduction="mean"))
    ref = _focal_loss_ref(logits, targets, reduction="mean")
    assert jnp.allclose(out, ref, rtol=1e-5, atol=1e-6), (out, ref)

    # sum
    out = jax.block_until_ready(focal_loss(logits, targets, reduction="sum"))
    ref = _focal_loss_ref(logits, targets, reduction="sum")
    assert jnp.allclose(out, ref, rtol=1e-5, atol=1e-6), (out, ref)

    # none (per-sample)
    out = jax.block_until_ready(focal_loss(logits, targets, reduction="none"))
    ref = _focal_loss_ref(logits, targets, reduction="none")
    assert out.shape == (N,)
    assert jnp.allclose(out, ref, rtol=1e-5, atol=1e-6), (out, ref)

    # awkward batch size (exercises ragged final block + in-kernel row mask,
    # with NO wrapper-side padding of the logits)
    N2 = 13
    out = jax.block_until_ready(
        focal_loss(logits[:N2], targets[:N2], reduction="mean"))
    ref = _focal_loss_ref(logits[:N2], targets[:N2], reduction="mean")
    assert jnp.allclose(out, ref, rtol=1e-5, atol=1e-6), (out, ref)

    # non-integer gamma (pow path with clamped 1 - pt)
    out = jax.block_until_ready(
        focal_loss(logits, targets, gamma=1.5, reduction="mean"))
    ref = _focal_loss_ref(logits, targets, gamma=1.5, reduction="mean")
    assert jnp.allclose(out, ref, rtol=1e-5, atol=1e-6), (out, ref)

    # bf16 logits (native-dtype HBM reads, f32 math inside the kernel)
    logits_bf16 = logits.astype(jnp.bfloat16)
    out = jax.block_until_ready(focal_loss(logits_bf16, targets, reduction="mean"))
    ref = _focal_loss_ref(logits_bf16, targets, reduction="mean")
    assert jnp.allclose(out, ref, rtol=1e-4, atol=1e-5), (out, ref)

    print("KERNEL_OK")
</pallas_src>

<mosaic_0001>
module attributes {stable_mosaic.version = 11 : i64} {
  func.func @_focal_reduce_kernel(%arg0: i32, %arg1: i32, %arg2: memref<8x32xf32, #tpu.memory_space<vmem>>, %arg3: memref<8x1xi32, #tpu.memory_space<vmem>>, %arg4: memref<1x8x128xf32, #tpu.memory_space<vmem>>, %arg5: memref<8x1xf32, #tpu.memory_space<vmem>>) attributes {dimension_semantics = [#tpu.dimension_semantics<parallel>, #tpu.dimension_semantics<arbitrary>], iteration_bounds = array<i64: 1, 2>, scalar_prefetch = 0 : i64, scratch_operands = 1 : i64, tpu.core_type = #tpu.core_type<tc>, window_params = [{transform_indices = @transform_0, window_bounds = array<i64: 8, 32>}, {transform_indices = @transform_1, window_bounds = array<i64: 8, 1>}, {transform_indices = @transform_2, window_bounds = array<i64: 1, 8, 128>}]} {
    %c0_i32 = arith.constant 0 : i32
    %0 = arith.cmpi eq, %arg1, %c0_i32 : i32
    %1 = arith.extui %0 : i1 to i32
    %c0_i32_0 = arith.constant 0 : i32
    %2 = arith.cmpi ne, %1, %c0_i32_0 : i32
    scf.if %2 {
      %cst_18 = arith.constant 0.000000e+00 : f32
      %51 = vector.broadcast %cst_18 : f32 to vector<8x1xf32>
      %c0_19 = arith.constant 0 : index
      %c0_20 = arith.constant 0 : index
      %52 = vector.load %arg5[%c0_19, %c0_20] : memref<8x1xf32, #tpu.memory_space<vmem>>, vector<8x1xf32>
      tpu.vector_store %arg5[%c0_19, %c0_20], %51 {strides = array<i32>} : memref<8x1xf32, #tpu.memory_space<vmem>>, vector<8x1xf32>,
    } else {
    }
    %c0 = arith.constant 0 : index
    %c0_1 = arith.constant 0 : index
    %3 = vector.load %arg2[%c0, %c0_1] : memref<8x32xf32, #tpu.memory_space<vmem>>, vector<8x32xf32>
    %c0_2 = arith.constant 0 : index
    %c0_3 = arith.constant 0 : index
    %4 = vector.load %arg3[%c0_2, %c0_3] : memref<8x1xi32, #tpu.memory_space<vmem>>, vector<8x1xi32>
    %5 = tpu.iota {dimensions = array<i32: 1>} : vector<8x32xi32>
    %6 = vector.broadcast %4 : vector<8x1xi32> to vector<8x32xi32>
    %7 = arith.cmpi eq, %5, %6 : vector<8x32xi32>
    %cst = arith.constant dense<0xFF800000> : vector<8xf32>
    %8 = vector.multi_reduction <maximumf>, %3, %cst [1] : vector<8x32xf32> to vector<8xf32>
    %9 = vector.shape_cast %8 : vector<8xf32> to vector<8x1xf32>
    %10 = vector.broadcast %9 : vector<8x1xf32> to vector<8x32xf32>
    %11 = arith.subf %3, %10 : vector<8x32xf32>
    %12 = math.exp %11 : vector<8x32xf32>
    %cst_4 = arith.constant dense<0.000000e+00> : vector<8xf32>
    %13 = vector.multi_reduction <add>, %12, %cst_4 [1] : vector<8x32xf32> to vector<8xf32>
    %14 = vector.shape_cast %13 : vector<8xf32> to vector<8x1xf32>
    %15 = math.log %14 : vector<8x1xf32>
    %16 = arith.addf %9, %15 : vector<8x1xf32>
    %cst_5 = arith.constant 0.000000e+00 : f32
    %17 = vector.broadcast %cst_5 : f32 to vector<8x32xf32>
    %18 = arith.select %7, %3, %17 : vector<8x32xi1>, vector<8x32xf32>
    %cst_6 = arith.constant dense<0.000000e+00> : vector<8xf32>
    %19 = vector.multi_reduction <add>, %18, %cst_6 [1] : vector<8x32xf32> to vector<8xf32>
    %20 = vector.shape_cast %19 : vector<8xf32> to vector<8x1xf32>
    %21 = arith.subf %16, %20 : vector<8x1xf32>
    %cst_7 = arith.constant 0.000000e+00 : f32
    %22 = vector.broadcast %cst_7 : f32 to vector<8x1xf32>
    %23 = arith.subf %22, %21 : vector<8x1xf32>
    %24 = math.exp %23 : vector<8x1xf32>
    %cst_8 = arith.constant 1.000000e+00 : f32
    %25 = vector.broadcast %cst_8 : f32 to vector<8x1xf32>
    %26 = arith.subf %25, %24 : vector<8x1xf32>
    %cst_9 = arith.constant 0.000000e+00 : f32
    %27 = vector.broadcast %cst_9 : f32 to vector<8x1xf32>
    %28 = arith.maximumf %26, %27 : vector<8x1xf32>
    %cst_10 = arith.constant 1.000000e+00 : f32
    %29 = vector.broadcast %cst_10 : f32 to vector<8x1xf32>
    %30 = arith.mulf %29, %28 : vector<8x1xf32>
    %31 = arith.mulf %30, %28 : vector<8x1xf32>
    %cst_11 = arith.constant 2.500000e-01 : f32
    %32 = vector.broadcast %cst_11 : f32 to vector<8x1xf32>
    %33 = arith.mulf %32, %31 : vector<8x1xf32>
    %34 = arith.mulf %33, %21 : vector<8x1xf32>
    %c2_i32 = arith.constant 2 : i32
    %35 = arith.muli %arg0, %c2_i32 : i32
    %36 = arith.addi %35, %arg1 : i32
    %37 = tpu.iota {dimensions = array<i32: 0>} : vector<8x1xi32>
    %c8_i32 = arith.constant 8 : i32
    %38 = arith.muli %36, %c8_i32 : i32
    %39 = vector.broadcast %38 : i32 to vector<8x1xi32>
    %40 = arith.addi %37, %39 : vector<8x1xi32>
    %c0_12 = arith.constant 0 : index
    %c0_13 = arith.constant 0 : index
    %41 = vector.load %arg5[%c0_12, %c0_13] : memref<8x1xf32, #tpu.memory_space<vmem>>, vector<8x1xf32>
    %c16_i32 = arith.constant 16 : i32
    %42 = vector.broadcast %c16_i32 : i32 to vector<8x1xi32>
    %43 = arith.cmpi slt, %40, %42 : vector<8x1xi32>
    %cst_14 = arith.constant 0.000000e+00 : f32
    %44 = vector.broadcast %cst_14 : f32 to vector<8x1xf32>
    %45 = arith.select %43, %34, %44 : vector<8x1xi1>, vector<8x1xf32>
    %46 = arith.addf %41, %45 : vector<8x1xf32>
    %c0_15 = arith.constant 0 : index
    %c0_16 = arith.constant 0 : index
    %47 = vector.load %arg5[%c0_15, %c0_16] : memref<8x1xf32, #tpu.memory_space<vmem>>, vector<8x1xf32>
    tpu.vector_store %arg5[%c0_15, %c0_16], %46 {strides = array<i32>} : memref<8x1xf32, #tpu.memory_space<vmem>>, vector<8x1xf32>,
    %c1_i32 = arith.constant 1 : i32
    %48 = arith.cmpi eq, %arg1, %c1_i32 : i32
    %49 = arith.extui %48 : i1 to i32
    %c0_i32_17 = arith.constant 0 : i32
    %50 = arith.cmpi ne, %49, %c0_i32_17 : i32
    scf.if %50 {
      %c0_18 = arith.constant 0 : index
      %c0_19 = arith.constant 0 : index
      %51 = vector.load %arg5[%c0_18, %c0_19] : memref<8x1xf32, #tpu.memory_space<vmem>>, vector<8x1xf32>
      %52 = vector.shape_cast %51 : vector<8x1xf32> to vector<1x8x1xf32>
      %cst_20 = arith.constant dense<0.000000e+00> : vector<1xf32>
      %53 = vector.multi_reduction <add>, %52, %cst_20 [1, 2] : vector<1x8x1xf32> to vector<1xf32>
      %54 = vector.shape_cast %53 : vector<1xf32> to vector<1x1x1xf32>
      %55 = vector.extract %54[0, 0, 0] : f32 from vector<1x1x1xf32>
      %56 = vector.broadcast %55 : f32 to vector<1x1x1xf32>
      %57 = vector.shape_cast %56 : vector<1x1x1xf32> to vector<1x1x1xf32>
      %58 = vector.broadcast %57 : vector<1x1x1xf32> to vector<1x8x128xf32>
      %c0_21 = arith.constant 0 : index
      %c0_22 = arith.constant 0 : index
      %c0_23 = arith.constant 0 : index
      %59 = vector.load %arg4[%c0_21, %c0_22, %c0_23] : memref<1x8x128xf32, #tpu.memory_space<vmem>>, vector<1x8x128xf32>
      tpu.vector_store %arg4[%c0_21, %c0_22, %c0_23], %58 {strides = array<i32>} : memref<1x8x128xf32, #tpu.memory_space<vmem>>, vector<1x8x128xf32>,
    } else {
    }
    return
  }
  func.func @transform_0(%arg0: i32, %arg1: i32) -> (i32, i32) {
    %c2_i32 = arith.constant 2 : i32
    %0 = arith.muli %arg0, %c2_i32 : i32
    %1 = arith.addi %0, %arg1 : i32
    %c1_i32 = arith.constant 1 : i32
    %2 = arith.minsi %1, %c1_i32 : i32
    %c0_i32 = arith.constant 0 : i32
    %c0_i32_0 = arith.constant 0 : i32
    return %2, %c0_i32 : i32, i32
  }
  func.func @transform_1(%arg0: i32, %arg1: i32) -> (i32, i32) {
    %c2_i32 = arith.constant 2 : i32
    %0 = arith.muli %arg0, %c2_i32 : i32
    %1 = arith.addi %0, %arg1 : i32
    %c1_i32 = arith.constant 1 : i32
    %2 = arith.minsi %1, %c1_i32 : i32
    %c0_i32 = arith.constant 0 : i32
    %c0_i32_0 = arith.constant 0 : i32
    return %2, %c0_i32 : i32, i32
  }
  func.func @transform_2(%arg0: i32, %arg1: i32) -> (i32, i32, i32) {
    %c0_i32 = arith.constant 0 : i32
    %c0_i32_0 = arith.constant 0 : i32
    %c0_i32_1 = arith.constant 0 : i32
    return %arg0, %c0_i32, %c0_i32_0 : i32, i32, i32
  }
}

</mosaic_0001>

<llo_original>
// kernel: tpu_custom_call.1
$region0: #{tpu_custom_call.1}
  #allocation0 [shape = 'u32[]', space=smem, size = 0x4, offset = 0x4, fixed_abs, tag = 'smem constant byte address 0x4 - core index']
  #allocation1 [shape = 'u32[144,128]{1,0:T(1,128)}', space=vmem, size = 0x12000, scoped, tag = 'internal scratch']
  #allocation2 [shape = 'f32[8,1]{1,0:T(8,128)}', space=vmem, size = 0x1000, scoped, tag = 'scratch operand']
  %s0 = inlined_call_operand.vmem [shape: f32[16,32], index: 0, kind: input, shape index: {}]
  %s1 = inlined_call_operand.vmem [shape: s32[16,1], index: 1, kind: input, shape index: {}]
  %s2 = inlined_call_operand.hbm [shape: f32[1,8,128], index: 2, kind: output, shape index: {}]
  %s3 = sld [smem:[#allocation0]]
  $region49: #{tpu_custom_call.1} parent=0
    _
  %s5 = ssub.s32 1, %s3
  %s6 = scalar_select 0, %s5, %s3
  $region1: #{tpu_custom_call.1} parent=0
    #allocation3 [shape = 'u8[4096]{0}', space=vmem, size = 0x1000, scoped, tag = 'output window, operand 0, single buffered']
    #allocation4 [shape = 's32[2]{0}', space=sflag, size = 0x8, scoped, tag = 'scoped memory for tpu_custom_call.1']
    %7 = vsyncpa [#allocation4], 0
    loop: start=0, step=1, limit=4
    $region2: #{tpu_custom_call.1} parent=1 // loop_pre_header
      _
    $region3: #{tpu_custom_call.1} parent=1 // loop_header
      %s9 = sphi 0, %s13
      %p10 = scmp.ge.s32.totalorder %s9, 4
      %s16 = sphi 0, %s28
      %s17 = sphi 0, %s24
      %s18 = sphi 0, %s16
      %s19 = sphi 0, %s17
      %s20 = sphi 0, %s18
      %s21 = sphi 0, %s19
      %s39 = sphi 0, %s41
      %s42 = sphi 0, %s39
      %s43 = sphi 0, %s42
      %s59 = sphi 0, %s43
      %s73 = sphi 0, %s75
      %s76 = sphi 0, %s73
      %s77 = sphi 0, %s76
      %s93 = sphi 0, %s77
      %s99 = sphi 0, %s101
      %s102 = sphi 0, %s99
      %s103 = sphi 0, %s102
      %s119 = sphi 0, %s103
    $region4: #{tpu_custom_call.1} parent=1 // loop_header_branch
      %12 = sbr.rel (%p10) target = $region8
    $region5: #{tpu_custom_call.1} parent=1 // loop_body
      %s14 = ssub.s32 %s9, 1
      %s15 = ssub.s32 %s9, 2
      %s22 = sadd.s32 1, %s17
      %p23 = scmp.ge.s32.totalorder %s22, 2
      %s24 = scalar_select %p23, 0, %s22
      %s25 = sadd.s32 1, %s16
      %s26 = scalar_select %p23, %s25, %s16
      %p27 = scmp.ge.s32.totalorder %s26, 1
      %s28 = scalar_select %p27, 0, %s26
      %s29 = smul.u32 %s16, 2
      %s30 = sadd.s32 %s29, %s17
      %p31 = scmp.lt.s32.totalorder %s30, 1
      %s32 = scalar_select %p31, %s30, 1
      %s33 = smul.u32 %s28, 2
      %s34 = sadd.s32 %s33, %s24
      %p35 = scmp.lt.s32.totalorder %s34, 1
      %s36 = scalar_select %p35, %s34, 1
      %s37 = ssub.s32 %s32, %s36
      %p38 = scmp.eq.s32.totalorder %s37, 0
      %s40 = sadd.s32 %s39, 1
      %s41 = scalar_select %p38, %s39, %s40
      %p44 = pneg %p38
      %p45 = scmp.eq.s32.totalorder %s9, 1
      %p46 = por %p44, %p45
      %p47 = scmp.ne.s32.totalorder %s39, %s42
      %p48 = scmp.eq.s32.totalorder %s9, 0
      %p49 = por %p47, %p48
      %p50 = scmp.ne.s32.totalorder %s39, %s42
      %p51 = scmp.eq.s32.totalorder %s14, 1
      %p52 = por %p50, %p51
      %p53 = scmp.ne.s32.totalorder %s42, %s43
      %p54 = scmp.eq.s32.totalorder %s14, 0
      %p55 = por %p53, %p54
      %p56 = scmp.ne.s32.totalorder %s42, %s43
      %p57 = scmp.eq.s32.totalorder %s15, 1
      %p58 = por %p56, %p57
      %p60 = scmp.ne.s32.totalorder %s43, %s59
      %p61 = scmp.eq.s32.totalorder %s15, 0
      %p62 = por %p60, %p61
      %s63 = smul.u32 %s16, 2
      %s64 = sadd.s32 %s63, %s17
      %p65 = scmp.lt.s32.totalorder %s64, 1
      %s66 = scalar_select %p65, %s64, 1
      %s67 = smul.u32 %s28, 2
      %s68 = sadd.s32 %s67, %s24
      %p69 = scmp.lt.s32.totalorder %s68, 1
      %s70 = scalar_select %p69, %s68, 1
      %s71 = ssub.s32 %s66, %s70
      %p72 = scmp.eq.s32.totalorder %s71, 0
      %s74 = sadd.s32 %s73, 1
      %s75 = scalar_select %p72, %s73, %s74
      %p78 = pneg %p72
      %p79 = scmp.eq.s32.totalorder %s9, 1
      %p80 = por %p78, %p79
      %p81 = scmp.ne.s32.totalorder %s73, %s76
      %p82 = scmp.eq.s32.totalorder %s9, 0
      %p83 = por %p81, %p82
      %p84 = scmp.ne.s32.totalorder %s73, %s76
      %p85 = scmp.eq.s32.totalorder %s14, 1
      %p86 = por %p84, %p85
      %p87 = scmp.ne.s32.totalorder %s76, %s77
      %p88 = scmp.eq.s32.totalorder %s14, 0
      %p89 = por %p87, %p88
      %p90 = scmp.ne.s32.totalorder %s76, %s77
      %p91 = scmp.eq.s32.totalorder %s15, 1
      %p92 = por %p90, %p91
      %p94 = scmp.ne.s32.totalorder %s77, %s93
      %p95 = scmp.eq.s32.totalorder %s15, 0
      %p96 = por %p94, %p95
      %s97 = ssub.s32 %s16, %s28
      %p98 = scmp.eq.s32.totalorder %s97, 0
      %s100 = sadd.s32 %s99, 1
      %s101 = scalar_select %p98, %s99, %s100
      %p104 = pneg %p98
      %p105 = scmp.eq.s32.totalorder %s9, 1
      %p106 = por %p104, %p105
      %p107 = scmp.ne.s32.totalorder %s99, %s102
      %p108 = scmp.eq.s32.totalorder %s9, 0
      %p109 = por %p107, %p108
      %p110 = scmp.ne.s32.totalorder %s99, %s102
      %p111 = scmp.eq.s32.totalorder %s14, 1
      %p112 = por %p110, %p111
      %p113 = scmp.ne.s32.totalorder %s102, %s103
      %p114 = scmp.eq.s32.totalorder %s14, 0
      %p115 = por %p113, %p114
      %p116 = scmp.ne.s32.totalorder %s102, %s103
      %p117 = scmp.eq.s32.totalorder %s15, 1
      %p118 = por %p116, %p117
      %p120 = scmp.ne.s32.totalorder %s103, %s119
      %p121 = scmp.eq.s32.totalorder %s15, 0
      %p122 = por %p120, %p121
      %p123 = scmp.le.s32.totalorder 1, %s9
      %p124 = scmp.lt.s32.totalorder %s9, 3
      %p125 = pnand %p123, %p124
      %p126 = pneg %p125
      // Predicated region
      $region9: #{tpu_custom_call.1} parent=5 // pred_check
        _
      $region10: #{tpu_custom_call.1} parent=5 // pred_check_branch
        %128 = sbr.rel (%p125) target = $region12
      $region11: #{tpu_custom_call.1} parent=5 // pred_region
        %s129 = ssub.s32 %s9, 1
      $region12: #{tpu_custom_call.1} parent=5 // pred_fallthru
        _
      %p130 = scmp.lt.s32.totalorder %s9, 2
      // Predicated region
      $region13: #{tpu_custom_call.1} parent=5 // pred_check
        %p131 = pneg %p130
      $region14: #{tpu_custom_call.1} parent=5 // pred_check_branch
        %133 = sbr.rel (%p131) target = $region16
      $region15: #{tpu_custom_call.1} parent=5 // pred_region
        // Predicated region
        $region17: #{tpu_custom_call.1} parent=15 // pred_check
          %p134 = pneg %p49
        $region18: #{tpu_custom_call.1} parent=15 // pred_check_branch
          %136 = sbr.rel (%p134) target = $region20
        $region19: #{tpu_custom_call.1} parent=15 // pred_region
          %s137 = smul.u32 %s16, 2
          %s138 = sadd.s32 %s137, %s17
          %p139 = scmp.lt.s32.totalorder %s138, 1
          %s140 = scalar_select %p139, %s138, 1
          %p141 = scmp.lt.s32.totalorder %s140, 1
          %s142 = scalar_select %p141, %s140, 1
          %s143 = smul.addr %s142, 8
          %s144 = scalar_lea.vmem %s0, %s143
          %s145 = smul.u32 %s16, 2
          %s146 = sadd.s32 %s145, %s17
          %p147 = scmp.lt.s32.totalorder %s146, 1
          %s148 = scalar_select %p147, %s146, 1
        $region20: #{tpu_custom_call.1} parent=15 // pred_fallthru
          _
        // Predicated region
        $region21: #{tpu_custom_call.1} parent=15 // pred_check
          %p149 = pneg %p83
        $region22: #{tpu_custom_call.1} parent=15 // pred_check_branch
          %151 = sbr.rel (%p149) target = $region24
        $region23: #{tpu_custom_call.1} parent=15 // pred_region
          %s152 = smul.u32 %s16, 2
          %s153 = sadd.s32 %s152, %s17
          %p154 = scmp.lt.s32.totalorder %s153, 1
          %s155 = scalar_select %p154, %s153, 1
          %p156 = scmp.lt.s32.totalorder %s155, 1
          %s157 = scalar_select %p156, %s155, 1
          %s158 = smul.addr %s157, 8
          %s159 = scalar_lea.vmem %s1, %s158
          %s160 = smul.u32 %s16, 2
          %s161 = sadd.s32 %s160, %s17
          %p162 = scmp.lt.s32.totalorder %s161, 1
          %s163 = scalar_select %p162, %s161, 1
        $region24: #{tpu_custom_call.1} parent=15 // pred_fallthru
          _
      $region16: #{tpu_custom_call.1} parent=5 // pred_fallthru
        _
      %p164 = scmp.le.s32.totalorder 1, %s9
      %p165 = scmp.lt.s32.totalorder %s9, 3
      %p166 = pnand %p164, %p165
      %p167 = pneg %p166
      // Predicated region
      $region25: #{tpu_custom_call.1} parent=5 // pred_check
        _
      $region26: #{tpu_custom_call.1} parent=5 // pred_check_branch
        %169 = sbr.rel (%p166) target = $region28
      $region27: #{tpu_custom_call.1} parent=5 // pred_region
        %s170 = ssub.s32 %s9, 1
        %s171 = smul.u32 %s18, 2
        %s172 = sadd.s32 %s171, %s19
        %p173 = scmp.lt.s32.totalorder %s172, 1
        %s174 = scalar_select %p173, %s172, 1
        %p175 = scmp.lt.s32.totalorder %s174, 1
        %s176 = scalar_select %p175, %s174, 1
        %s177 = smul.addr %s176, 8
        %s178 = scalar_lea.vmem %s0, %s177
        %p179 = pneg %p55
        %p180 = pneg %p52
        %s181 = smul.u32 %s18, 2
        %s182 = sadd.s32 %s181, %s19
        %p183 = scmp.lt.s32.totalorder %s182, 1
        %s184 = scalar_select %p183, %s182, 1
        %p185 = scmp.lt.s32.totalorder %s184, 1
        %s186 = scalar_select %p185, %s184, 1
        %s187 = smul.addr %s186, 8
        %s188 = scalar_lea.vmem %s1, %s187
        %p189 = pneg %p89
        %p190 = pneg %p86
        %p191 = pneg %p115
        %p192 = pneg %p112
        %s193 = smul.u32 %s18, 2
        %s194 = sadd.s32 %s193, %s19
        %p195 = scmp.lt.s32.totalorder %s194, 1
        %s196 = scalar_select %p195, %s194, 1
        %p197 = scmp.lt.s32.totalorder %s196, 1
        %s198 = scalar_select %p197, %s196, 1
        %s199 = smul.addr %s198, 8
        %s200 = scalar_lea.vmem %s0, %s199
        %s201 = smul.u32 %s18, 2
        %s202 = sadd.s32 %s201, %s19
        %p203 = scmp.lt.s32.totalorder %s202, 1
        %s204 = scalar_select %p203, %s202, 1
        %s205 = smul.u32 %s18, 2
        %s206 = sadd.s32 %s205, %s19
        %p207 = scmp.lt.s32.totalorder %s206, 1
        %s208 = scalar_select %p207, %s206, 1
        %p209 = scmp.lt.s32.totalorder %s208, 1
        %s210 = scalar_select %p209, %s208, 1
        %s211 = smul.addr %s210, 8
        %s212 = scalar_lea.vmem %s1, %s211
        %s213 = smul.u32 %s18, 2
        %s214 = sadd.s32 %s213, %s19
        %p215 = scmp.lt.s32.totalorder %s214, 1
        %s216 = scalar_select %p215, %s214, 1
        %p217 = scmp.eq.s32.totalorder %s19, 0
        // Predicated region
        $region29: #{tpu_custom_call.1} parent=27 // pred_check
          %p218 = pneg %p217
        $region30: #{tpu_custom_call.1} parent=27 // pred_check_branch
          %220 = sbr.rel (%p218) target = $region32
        $region31: #{tpu_custom_call.1} parent=27 // pred_region
          %vm221 = vcmask 7168
          %222 = vst.msk [vmem:[#allocation2] sm:$0xff] %vm221, 0.0
        $region32: #{tpu_custom_call.1} parent=27 // pred_fallthru
          _
        %v223 = vld [vmem:[%s200] sm:$0xff]
        %v224 = vld [vmem:[%s212] sm:$0xff]
        %v225 = vlaneseq
        %v226 = vand.u32 %v225, 127
        %227 = vset.pattern.permute.xlu0 0
        %228 = vperm.xlu0 %227, %v224
        %v229 = vpop.permute.xlu0 %228
        %vm230 = vcmp.eq.s32.totalorder %v226, %v229
        %vm231 = vcmask 261120
        %v232 = vsel %vm231, %v223, -inf
        %233 = vmax.xlane.f32.xlu0 %v232
        %v234 = vpop.xlane.xlu0 %233
        %v235 = vsub.f32 %v223, %v234
        %v236 = vmul.f32 %v235, 1.442695
        %v237 = vpow.pop %v236
        %v238 = vsel %vm231, %v237, 0.0
        %239 = vadd.xlane.f32.xlu0 %v238
        %v240 = vpop.xlane.xlu0 %239
        %v241 = vlog2.pop %v240
        %v242 = vmul.f32 %v241, 0.6931472
        %v243 = vadd.f32 %v234, %v242
        %v244 = vsel %vm230, %v223, 0.0
        %v245 = vsel %vm231, %v244, 0.0
        %246 = vadd.xlane.f32.xlu0 %v245
        %v247 = vpop.xlane.xlu0 %246
        %v248 = vsub.f32 %v243, %v247
        %v249 = vsub.f32 0.0, %v248
        %v250 = vmul.f32 %v249, 1.442695
        %v251 = vpow.pop %v250
        %v252 = vsub.f32 1.0, %v251
        %v253 = vmax.f32 %v252, 0.0
        %v254 = vmul.f32 %v253, %v253
        %v255 = vmul.f32 %v254, 0.25
        %v256 = vmul.f32 %v255, %v248
        %s257 = smul.u32 %s18, 2
        %s258 = sadd.s32 %s257, %s19
        %v259 = vlaneseq
        %v260 = vshrl.u32 %v259, 7
        %s261 = smul.u32 %s258, 8
        %v262 = vstv %s261
        %v263 = vadd.s32 %v260, %v262
        %v264 = vld [vmem:[#allocation2] sm:$0xff]
        %vm265 = vcmp.lt.s32.totalorder %v263, 16
        %v266 = vsel %vm265, %v256, 0.0
        %v267 = vadd.f32 %v264, %v266
        %vm268 = vcmask 7168
        %269 = vst.msk [vmem:[#allocation2] sm:$0xff] %vm268, %v267
        %p270 = scmp.eq.s32.totalorder %s19, 1
        // Predicated region
        $region33: #{tpu_custom_call.1} parent=27 // pred_check
          %p271 = pneg %p270
        $region34: #{tpu_custom_call.1} parent=27 // pred_check_branch
          %273 = sbr.rel (%p271) target = $region36
        $region35: #{tpu_custom_call.1} parent=27 // pred_region
          %v274 = vld [vmem:[#allocation2] sm:$0xff]
          %v275 = vsel %vm268, %v274, 0.0
          %276 = vadd.xlane.f32.xlu0 %v275
          %v277 = vpop.xlane.xlu0 %276
          %v278 = vrot.slane %v277, 4
          %v279 = vadd.f32 %v277, %v278
          %v280 = vrot.slane %v279, 2
          %v281 = vadd.f32 %v279, %v280
          %v282 = vrot.slane %v281, 1
          %v283 = vadd.f32 %v281, %v282
          %s284 = vtos %v283
          %v285 = vstv %s284
          %286 = vst [vmem:[#allocation3] sm:$0xff] %v285
        $region36: #{tpu_custom_call.1} parent=27 // pred_fallthru
          _
        // Predicated region
        $region37: #{tpu_custom_call.1} parent=27 // pred_check
          %p287 = pneg %p112
        $region38: #{tpu_custom_call.1} parent=27 // pred_check_branch
          %289 = sbr.rel (%p287) target = $region40
        $region39: #{tpu_custom_call.1} parent=27 // pred_region
          %s291 = ssub.s32 128, 128
          %292 = vsyncadd [#allocation4], %s291
          %s293 = smul.addr %s18, 128
          %s294 = scalar_lea.hbm %s2, %s293
          %s296 = sshll.u32 [#allocation3], 4
          %s297 = int_to_ptr.vmem [resolvable:$true] %s296
          %299 = dma.vmem_to_hbm [thread:$0]  %s297, 128, %s294, [#allocation4]
        $region40: #{tpu_custom_call.1} parent=27 // pred_fallthru
          _
        // Predicated region
        $region41: #{tpu_custom_call.1} parent=27 // pred_check
          %p300 = pneg %p112
        $region42: #{tpu_custom_call.1} parent=27 // pred_check_branch
          %302 = sbr.rel (%p300) target = $region44
        $region43: #{tpu_custom_call.1} parent=27 // pred_region
          %303 = dma.done [#allocation4], 128
        $region44: #{tpu_custom_call.1} parent=27 // pred_fallthru
          _
      $region28: #{tpu_custom_call.1} parent=5 // pred_fallthru
        _
      %p304 = scmp.le.s32.totalorder 2, %s9
      // Predicated region
      $region45: #{tpu_custom_call.1} parent=5 // pred_check
        %p305 = pneg %p304
      $region46: #{tpu_custom_call.1} parent=5 // pred_check_branch
        %307 = sbr.rel (%p305) target = $region48
      $region47: #{tpu_custom_call.1} parent=5 // pred_region
        %s308 = ssub.s32 %s9, 2
      $region48: #{tpu_custom_call.1} parent=5 // pred_fallthru
        _
    $region6: #{tpu_custom_call.1} parent=1 // loop_footer
      %s13 = sadd.s32 1, %s9
    $region7: #{tpu_custom_call.1} parent=1 // loop_footer_branch
      %8 = sbr.rel target = $region3
    $region8: #{tpu_custom_call.1} parent=1 // loop_exit
      _
    %309 = vsyncpa [#allocation4], 1
    %s310 = scalar_lea.sflag [#allocation4], 1
    %311 = vsyncpa %s310, 1

</llo_original>
